<compile_context>
chip_gen: v6e
topology: v6e:2x2x1
jax: 0.10.0
libtpu: 0.0.40
codegen_flags: <defaults>
</compile_context>

<pallas_src>
import functools

import jax
import jax.numpy as jnp
from jax.experimental import pallas as pl
from jax.experimental.pallas import tpu as pltpu


def _round_up(x, m):
    return ((x + m - 1) // m) * m


def _vmem_budget(estimate_bytes, *, headroom=8 << 20, floor=32 << 20, cap=100 << 20):
    """Explicit scoped-VMEM budget: 2x estimate + headroom, never below the default."""
    return int(min(cap, max(2 * estimate_bytes + headroom, floor)))


# ----------------------------- Pallas kernels --------------------------------

def _conv_stats_kernel(x_ref, w_ref, y_ref, stats_ref, xpad_ref, *maybe_rhs, K,
                       stride, dilation, pad, off, t, v, t_out, stack_taps):
    """Temporal conv (one batch element) + per-batch BN partial statistics.

    x_ref:     (1, C_in, T*V)        lane-dense unpadded input slab (input dtype)
    w_ref:     (C_out, K*C_in)       if stack_taps else (K, C_out, C_in)   [compute dtype]
    y_ref:     (1, C_out, T_out*V)   conv output (f32 intermediate)
    stats_ref: (1, C_out, 2)         per-channel [sum, sum_of_squares] for this batch elem
    xpad_ref:  (C_in, total)         VMEM scratch, zero-padded lane-dense input (compute dtype)
    maybe_rhs: (K*C_in, T_out*V)     VMEM scratch, only present when stack_taps
    """
    rhs_ref = maybe_rhs[0] if stack_taps else None
    c_in = x_ref.shape[1]
    L = t_out * v
    total = xpad_ref.shape[1]
    zl = off - pad * v                      # first padded column the taps actually read

    # Zero only the pad columns the taps read.  Done every grid step (not
    # @pl.when(program_id==0)) because scratch is per-TensorCore: under megacore
    # ("parallel") sharding the core that never sees program_id 0 would otherwise run
    # with uninitialized padding.  The region is tiny (a couple of hundred lanes).
    if off > zl:
        xpad_ref[:, zl:off] = jnp.zeros((c_in, off - zl), xpad_ref.dtype)
    if total > off + t * v:
        xpad_ref[:, off + t * v:total] = jnp.zeros((c_in, total - off - t * v),
                                                   xpad_ref.dtype)

    # Lane-aligned (off % 128 == 0) bulk copy of the input slab, cast to the compute
    # dtype (bf16 by default) on the way in -> unmasked full-width stores.
    # TODO(synk): for extra VMEM relief on v7x, DMA x straight from HBM into this slice
    # (memory_space=pl.ANY + make_async_copy, double-buffered) instead of BlockSpec
    # staging followed by this VMEM->VMEM copy.
    xpad_ref[:, off:off + t * v] = x_ref[0].astype(xpad_ref.dtype)

    def tap(k):
        base = zl + k * dilation * v
        if stride == 1:
            return xpad_ref[:, base:base + L]           # pure lane-offset slice
        # Rare fallback (stride > 1): contiguous load + in-VMEM relayout to realize the
        # time stride (scratch carries `stride-1` rows of slack at the end).
        # TODO(synk): replace with a strided DMA/gather if stride>1 ever becomes hot.
        blk = xpad_ref[:, base:base + t_out * stride * v]
        return blk.reshape(c_in, t_out, stride * v)[:, :, :v].reshape(c_in, L)

    if stack_taps:
        # Shallow C_in: stack the K taps into one (K*C_in, L) RHS so the whole conv is
        # a single MXU matmul with contraction depth K*C_in.
        for k in range(K):                              # K is a small static int
            rhs_ref[k * c_in:(k + 1) * c_in, :] = tap(k)
        acc = jnp.dot(w_ref[...], rhs_ref[...], preferred_element_type=jnp.float32)
    else:
        # Deep C_in: K accumulating matmuls on shifted xpad slices -> no RHS scratch
        # (v7x VMEM) and no stacking stores (v5e/v6e vst slot).
        acc = jnp.dot(w_ref[0], tap(0), preferred_element_type=jnp.float32)
        for k in range(1, K):
            acc = acc + jnp.dot(w_ref[k], tap(k), preferred_element_type=jnp.float32)

    # Conv bias intentionally omitted: it cancels exactly under training-mode BatchNorm.
    y_ref[0] = acc.astype(y_ref.dtype)

    # BN partial statistics computed from the f32 accumulator while the tile is on-chip,
    # so the normalize pass never re-reads y just for statistics.
    s = jnp.sum(acc, axis=1, keepdims=True)
    sq = jnp.sum(acc * acc, axis=1, keepdims=True)
    stats_ref[0] = jnp.concatenate([s, sq], axis=1)


def _bn_apply_kernel(y_ref, scale_ref, shift_ref, o_ref):
    """o = y*scale + shift on a lane-dense (row_tile, L) block; scale/shift: (row_tile, 1)."""
    y = y_ref[...].astype(jnp.float32)
    o_ref[...] = (y * scale_ref[...] + shift_ref[...]).astype(o_ref.dtype)


# ------------------------------- Wrapper --------------------------------------

def temporal_conv2d(x, weight, bias, gamma, beta, *, kernel_size, stride=1,
                    dilation=1, eps=1e-5, compute_dtype=jnp.bfloat16,
                    stack_taps=None):
    """Forward of TemporalConv2d: Conv2d((K,1), pad=(pad,0), stride=(s,1), dilation=(d,1))
    followed by training-mode BatchNorm2d (batch statistics, biased variance).

    x: (N, C_in, T, V); weight: (C_out, C_in, K, 1); bias/gamma/beta: (C_out,).
    `bias` is accepted for API parity but not applied: a per-channel constant added before
    training-mode BN has no effect on the output. `compute_dtype` (default bf16) is the
    MXU input dtype; accumulation is always f32.
    """
    del bias
    n, c_in, t, v = x.shape
    c_out = weight.shape[0]
    K = kernel_size
    pad = (K - 1) * dilation // 2
    t_out = (t + 2 * pad - dilation * (K - 1) - 1) // stride + 1
    L = t_out * v

    cdt = jnp.dtype(compute_dtype if compute_dtype is not None else x.dtype)
    csz = cdt.itemsize
    xsz = jnp.dtype(x.dtype).itemsize

    # Lane-aligned start of the input slab inside the padded scratch; tap k reads from
    # off - pad*v + k*dilation*v.
    off = _round_up(pad * v, 128) if pad > 0 else 0
    total = off + (t + pad) * v + (stride - 1) * v      # right pad + stride slack

    if stack_taps is None:
        # Stacked single-matmul RHS only pays off for shallow C_in; for deep C_in the
        # stacking stores cost as much as the matmul and the scratch can blow v7x VMEM.
        stack_taps = (c_in < 128) and (K * c_in * L * csz <= (8 << 20))

    # Lane-dense layouts: merge (T, V) into one trailing axis (metadata-only reshape).
    x_flat = x.reshape(n, c_in, t * v)
    if stack_taps:
        # (C_out, K*C_in): column block k holds tap k's (C_out, C_in) matrix.
        w_flat = jnp.transpose(weight[..., 0], (0, 2, 1)).reshape(c_out, K * c_in).astype(cdt)
        w_spec = pl.BlockSpec((c_out, K * c_in), lambda i: (0, 0))
        scratch = [pltpu.VMEM((c_in, total), cdt), pltpu.VMEM((K * c_in, L), cdt)]
    else:
        # (K, C_out, C_in): one LHS matrix per tap.
        w_flat = jnp.transpose(weight[..., 0], (2, 0, 1)).astype(cdt)
        w_spec = pl.BlockSpec((K, c_out, c_in), lambda i: (0, 0, 0))
        scratch = [pltpu.VMEM((c_in, total), cdt)]

    # Intermediate y kept in f32 for BN accuracy.  (On v6e/v7x it can be stored bf16 to
    # halve the HBM traffic of the mem-bound normalize pass at ~1e-2 output error.)
    y_dtype = jnp.float32

    conv_vmem = (2 * c_in * t * v * xsz            # x input block, double-buffered
                 + 2 * int(w_flat.size) * csz      # weight block
                 + 2 * c_out * L * 4               # y output block
                 + 2 * c_out * 2 * 4               # stats output block
                 + c_in * total * csz              # xpad scratch
                 + (K * c_in * L * csz if stack_taps else 0)
                 + c_out * L * 4)                  # matmul accumulator temp
    conv_fn = pl.pallas_call(
        functools.partial(_conv_stats_kernel, K=K, stride=stride, dilation=dilation,
                          pad=pad, off=off, t=t, v=v, t_out=t_out,
                          stack_taps=stack_taps),
        out_shape=(
            jax.ShapeDtypeStruct((n, c_out, L), y_dtype),
            jax.ShapeDtypeStruct((n, c_out, 2), jnp.float32),
        ),
        grid=(n,),
        in_specs=[pl.BlockSpec((1, c_in, t * v), lambda i: (i, 0, 0)), w_spec],
        out_specs=(
            pl.BlockSpec((1, c_out, L), lambda i: (i, 0, 0)),
            pl.BlockSpec((1, c_out, 2), lambda i: (i, 0, 0)),
        ),
        scratch_shapes=scratch,
        compiler_params=pltpu.CompilerParams(
            dimension_semantics=("parallel",),
            vmem_limit_bytes=_vmem_budget(conv_vmem)),
    )
    y_flat, stats = conv_fn(x_flat, w_flat)

    # Tiny (N, C_out, 2) reduction + scalar math: fold batch statistics into a single
    # per-channel scale/shift.  NOTE: one-pass E[y^2] - E[y]^2 in f32; fine for conv
    # outputs, consider a shifted/two-pass variant if channel means get very large.
    tot = jnp.sum(stats, axis=0)                        # (C_out, 2)
    count = jnp.float32(n * t_out * v)
    mean = tot[:, 0] / count
    var = tot[:, 1] / count - mean * mean               # biased variance (training BN)
    scale = gamma.astype(jnp.float32) * jax.lax.rsqrt(var + eps)
    shift = beta.astype(jnp.float32) - mean * scale

    # Normalize pass: purely memory-bound, so walk a lane-dense (N*C_out, L) slab with
    # large row tiles instead of tiny / huge per-batch blocks.
    rows = n * c_out
    y2d = y_flat.reshape(rows, L)                       # metadata-only reshape
    scale_rows = jnp.tile(scale, n).reshape(rows, 1)    # row b*C_out + c -> channel c
    shift_rows = jnp.tile(shift, n).reshape(rows, 1)

    max_rows = max(8, (4 << 20) // max(1, L * 4))       # keep blocks around <= 4 MiB
    row_tile = rows
    for cand in (512, 256, 128, 64, 32, 16, 8):
        if cand <= max_rows and rows % cand == 0:
            row_tile = cand
            break

    bn_vmem = 2 * row_tile * L * (4 + xsz) + 4 * row_tile * 4
    bn_fn = pl.pallas_call(
        _bn_apply_kernel,
        out_shape=jax.ShapeDtypeStruct((rows, L), x.dtype),
        grid=(pl.cdiv(rows, row_tile),),
        in_specs=[
            pl.BlockSpec((row_tile, L), lambda i: (i, 0)),
            pl.BlockSpec((row_tile, 1), lambda i: (i, 0)),
            pl.BlockSpec((row_tile, 1), lambda i: (i, 0)),
        ],
        out_specs=pl.BlockSpec((row_tile, L), lambda i: (i, 0)),
        compiler_params=pltpu.CompilerParams(
            dimension_semantics=("parallel",),
            vmem_limit_bytes=_vmem_budget(bn_vmem)),
    )
    out2d = bn_fn(y2d, scale_rows, shift_rows)
    return out2d.reshape(n, c_out, t_out, v)


# ------------------------------ Reference (pure JAX) ---------------------------

def _reference(x, weight, bias, gamma, beta, *, kernel_size, stride, dilation, eps):
    pad = (kernel_size - 1) * dilation // 2
    y = jax.lax.conv_general_dilated(
        x, weight,
        window_strides=(stride, 1),
        padding=((pad, pad), (0, 0)),
        rhs_dilation=(dilation, 1),
        dimension_numbers=("NCHW", "OIHW", "NCHW"),
    ) + bias.reshape(1, -1, 1, 1)
    mean = jnp.mean(y, axis=(0, 2, 3), keepdims=True)
    var = jnp.mean((y - mean) ** 2, axis=(0, 2, 3), keepdims=True)
    return (y - mean) / jnp.sqrt(var + eps) * gamma.reshape(1, -1, 1, 1) \
        + beta.reshape(1, -1, 1, 1)


# ---------------------------------- Main ---------------------------------------

if __name__ == "__main__":
    # Small, deterministic synthetic config (skeleton-like: T frames x V joints).
    N, C_in, C_out, T, V = 2, 4, 8, 16, 16
    K, STRIDE, DILATION = 3, 1, 1

    key = jax.random.PRNGKey(0)
    kx, kw, kb = jax.random.split(key, 3)

    x = jax.random.normal(kx, (N, C_in, T, V), dtype=jnp.float32)
    weight = 0.1 * jax.random.normal(kw, (C_out, C_in, K, 1), dtype=jnp.float32)
    bias = 0.05 * jax.random.normal(kb, (C_out,), dtype=jnp.float32)
    gamma = jnp.ones((C_out,), dtype=jnp.float32)   # BatchNorm2d default init
    beta = jnp.zeros((C_out,), dtype=jnp.float32)

    ref = _reference(x, weight, bias, gamma, beta, kernel_size=K, stride=STRIDE,
                     dilation=DILATION, eps=1e-5)

    # 1) f32 compute, stacked-tap path (auto for shallow C_in): tight tolerance.
    out_f32 = jax.block_until_ready(
        temporal_conv2d(x, weight, bias, gamma, beta, kernel_size=K, stride=STRIDE,
                        dilation=DILATION, compute_dtype=jnp.float32))
    assert out_f32.shape == (N, C_out, T, V), out_f32.shape
    assert jnp.allclose(out_f32, ref, atol=1e-4, rtol=1e-4), \
        float(jnp.max(jnp.abs(out_f32 - ref)))

    # 2) f32 compute, accumulating-matmul path (deep-C_in code path): tight tolerance.
    out_acc = jax.block_until_ready(
        temporal_conv2d(x, weight, bias, gamma, beta, kernel_size=K, stride=STRIDE,
                        dilation=DILATION, compute_dtype=jnp.float32, stack_taps=False))
    assert jnp.allclose(out_acc, ref, atol=1e-4, rtol=1e-4), \
        float(jnp.max(jnp.abs(out_acc - ref)))

    # 3) Default path (bf16 MXU inputs, f32 accumulation): bf16-level tolerance.
    out_bf16 = jax.block_until_ready(
        temporal_conv2d(x, weight, bias, gamma, beta, kernel_size=K, stride=STRIDE,
                        dilation=DILATION))
    assert jnp.allclose(out_bf16, ref, atol=5e-2, rtol=5e-2), \
        float(jnp.max(jnp.abs(out_bf16 - ref)))

    print("KERNEL_OK")
</pallas_src>

<mosaic_0001>
module attributes {stable_mosaic.version = 11 : i64} {
  func.func @_conv_stats_kernel(%arg0: i32, %arg1: memref<1x4x256xf32, #tpu.memory_space<vmem>>, %arg2: memref<8x12xf32, #tpu.memory_space<vmem>>, %arg3: memref<1x8x256xf32, #tpu.memory_space<vmem>>, %arg4: memref<1x8x2xf32, #tpu.memory_space<vmem>>, %arg5: memref<4x400xf32, #tpu.memory_space<vmem>>, %arg6: memref<12x256xf32, #tpu.memory_space<vmem>>) attributes {dimension_semantics = [#tpu.dimension_semantics<parallel>], iteration_bounds = array<i64: 2>, scalar_prefetch = 0 : i64, scratch_operands = 2 : i64, tpu.core_type = #tpu.core_type<tc>, window_params = [{transform_indices = @transform_0, window_bounds = array<i64: 1, 4, 256>}, {pipeline_mode = #tpu.pipeline_mode<synchronous>, transform_indices = @transform_1, window_bounds = array<i64: 8, 12>}, {transform_indices = @transform_2, window_bounds = array<i64: 1, 8, 256>}, {transform_indices = @transform_3, window_bounds = array<i64: 1, 8, 2>}]} {
    %cst = arith.constant 0.000000e+00 : f32
    %0 = vector.broadcast %cst : f32 to vector<4x16xf32>
    %c0 = arith.constant 0 : index
    %c112 = arith.constant 112 : index
    %1 = vector.load %arg5[%c0, %c112] : memref<4x400xf32, #tpu.memory_space<vmem>>, vector<4x16xf32>
    tpu.vector_store %arg5[%c0, %c112], %0 {strides = array<i32>} : memref<4x400xf32, #tpu.memory_space<vmem>>, vector<4x16xf32>,
    %cst_0 = arith.constant 0.000000e+00 : f32
    %2 = vector.broadcast %cst_0 : f32 to vector<4x16xf32>
    %c0_1 = arith.constant 0 : index
    %c384 = arith.constant 384 : index
    %3 = vector.load %arg5[%c0_1, %c384] : memref<4x400xf32, #tpu.memory_space<vmem>>, vector<4x16xf32>
    tpu.vector_store %arg5[%c0_1, %c384], %2 {strides = array<i32>} : memref<4x400xf32, #tpu.memory_space<vmem>>, vector<4x16xf32>,
    %c0_2 = arith.constant 0 : index
    %c0_3 = arith.constant 0 : index
    %c0_4 = arith.constant 0 : index
    %4 = vector.load %arg1[%c0_2, %c0_3, %c0_4] : memref<1x4x256xf32, #tpu.memory_space<vmem>>, vector<1x4x256xf32>
    %5 = vector.shape_cast %4 : vector<1x4x256xf32> to vector<4x256xf32>
    %c0_5 = arith.constant 0 : index
    %c128 = arith.constant 128 : index
    %6 = vector.load %arg5[%c0_5, %c128] : memref<4x400xf32, #tpu.memory_space<vmem>>, vector<4x256xf32>
    tpu.vector_store %arg5[%c0_5, %c128], %5 {strides = array<i32>} : memref<4x400xf32, #tpu.memory_space<vmem>>, vector<4x256xf32>,
    %c0_6 = arith.constant 0 : index
    %c112_7 = arith.constant 112 : index
    %7 = vector.load %arg5[%c0_6, %c112_7] : memref<4x400xf32, #tpu.memory_space<vmem>>, vector<4x256xf32>
    %c0_8 = arith.constant 0 : index
    %c0_9 = arith.constant 0 : index
    %8 = vector.load %arg6[%c0_8, %c0_9] : memref<12x256xf32, #tpu.memory_space<vmem>>, vector<4x256xf32>
    tpu.vector_store %arg6[%c0_8, %c0_9], %7 {strides = array<i32>} : memref<12x256xf32, #tpu.memory_space<vmem>>, vector<4x256xf32>,
    %c0_10 = arith.constant 0 : index
    %c128_11 = arith.constant 128 : index
    %9 = vector.load %arg5[%c0_10, %c128_11] : memref<4x400xf32, #tpu.memory_space<vmem>>, vector<4x256xf32>
    %c4 = arith.constant 4 : index
    %c0_12 = arith.constant 0 : index
    %10 = vector.load %arg6[%c4, %c0_12] : memref<12x256xf32, #tpu.memory_space<vmem>>, vector<4x256xf32>
    tpu.vector_store %arg6[%c4, %c0_12], %9 {strides = array<i32>} : memref<12x256xf32, #tpu.memory_space<vmem>>, vector<4x256xf32>,
    %c0_13 = arith.constant 0 : index
    %c144 = arith.constant 144 : index
    %11 = vector.load %arg5[%c0_13, %c144] : memref<4x400xf32, #tpu.memory_space<vmem>>, vector<4x256xf32>
    %c8 = arith.constant 8 : index
    %c0_14 = arith.constant 0 : index
    %12 = vector.load %arg6[%c8, %c0_14] : memref<12x256xf32, #tpu.memory_space<vmem>>, vector<4x256xf32>
    tpu.vector_store %arg6[%c8, %c0_14], %11 {strides = array<i32>} : memref<12x256xf32, #tpu.memory_space<vmem>>, vector<4x256xf32>,
    %c0_15 = arith.constant 0 : index
    %c0_16 = arith.constant 0 : index
    %13 = vector.load %arg2[%c0_15, %c0_16] : memref<8x12xf32, #tpu.memory_space<vmem>>, vector<8x12xf32>
    %c0_17 = arith.constant 0 : index
    %c0_18 = arith.constant 0 : index
    %14 = vector.load %arg6[%c0_17, %c0_18] : memref<12x256xf32, #tpu.memory_space<vmem>>, vector<12x256xf32>
    %cst_19 = arith.constant dense<0.000000e+00> : vector<8x256xf32>
    %15 = tpu.matmul %13, %14, %cst_19 {dimension_numbers = #tpu.dot_dimension_numbers<[1], [0], [0], [1], [0, 0, 1, 1], [], []>} : vector<8x12xf32>, vector<12x256xf32>, vector<8x256xf32> -> vector<8x256xf32>
    %c0_20 = arith.constant 0 : index
    %c0_21 = arith.constant 0 : index
    %c0_22 = arith.constant 0 : index
    %16 = vector.load %arg3[%c0_20, %c0_21, %c0_22] : memref<1x8x256xf32, #tpu.memory_space<vmem>>, vector<1x8x256xf32>
    %17 = vector.shape_cast %16 : vector<1x8x256xf32> to vector<8x256xf32>
    %18 = vector.shape_cast %15 : vector<8x256xf32> to vector<1x8x256xf32>
    tpu.vector_store %arg3[%c0_20, %c0_21, %c0_22], %18 {strides = array<i32>} : memref<1x8x256xf32, #tpu.memory_space<vmem>>, vector<1x8x256xf32>,
    %cst_23 = arith.constant dense<0.000000e+00> : vector<8xf32>
    %19 = vector.multi_reduction <add>, %15, %cst_23 [1] : vector<8x256xf32> to vector<8xf32>
    %20 = vector.shape_cast %19 : vector<8xf32> to vector<8x1xf32>
    %21 = arith.mulf %15, %15 : vector<8x256xf32>
    %cst_24 = arith.constant dense<0.000000e+00> : vector<8xf32>
    %22 = vector.multi_reduction <add>, %21, %cst_24 [1] : vector<8x256xf32> to vector<8xf32>
    %23 = vector.shape_cast %22 : vector<8xf32> to vector<8x1xf32>
    %24 = tpu.concatenate %20, %23 in 1 : vector<8x1xf32>, vector<8x1xf32> -> vector<8x2xf32>
    %c0_25 = arith.constant 0 : index
    %c0_26 = arith.constant 0 : index
    %c0_27 = arith.constant 0 : index
    %25 = vector.load %arg4[%c0_25, %c0_26, %c0_27] : memref<1x8x2xf32, #tpu.memory_space<vmem>>, vector<1x8x2xf32>
    %26 = vector.shape_cast %25 : vector<1x8x2xf32> to vector<8x2xf32>
    %27 = vector.shape_cast %24 : vector<8x2xf32> to vector<1x8x2xf32>
    tpu.vector_store %arg4[%c0_25, %c0_26, %c0_27], %27 {strides = array<i32>} : memref<1x8x2xf32, #tpu.memory_space<vmem>>, vector<1x8x2xf32>,
    return
  }
  func.func @transform_0(%arg0: i32) -> (i32, i32, i32) {
    %c0_i32 = arith.constant 0 : i32
    %c0_i32_0 = arith.constant 0 : i32
    %c0_i32_1 = arith.constant 0 : i32
    return %arg0, %c0_i32, %c0_i32_0 : i32, i32, i32
  }
  func.func @transform_1(%arg0: i32) -> (i32, i32) {
    %c0_i32 = arith.constant 0 : i32
    %c0_i32_0 = arith.constant 0 : i32
    %c0_i32_1 = arith.constant 0 : i32
    return %c0_i32, %c0_i32_0 : i32, i32
  }
  func.func @transform_2(%arg0: i32) -> (i32, i32, i32) {
    %c0_i32 = arith.constant 0 : i32
    %c0_i32_0 = arith.constant 0 : i32
    %c0_i32_1 = arith.constant 0 : i32
    return %arg0, %c0_i32, %c0_i32_0 : i32, i32, i32
  }
  func.func @transform_3(%arg0: i32) -> (i32, i32, i32) {
    %c0_i32 = arith.constant 0 : i32
    %c0_i32_0 = arith.constant 0 : i32
    %c0_i32_1 = arith.constant 0 : i32
    return %arg0, %c0_i32, %c0_i32_0 : i32, i32, i32
  }
}

</mosaic_0001>

<llo_original>
// kernel: tpu_custom_call.1
$region0: #{tpu_custom_call.1}
  #allocation0 [shape = 'u32[]', space=smem, size = 0x4, offset = 0x4, fixed_abs, tag = 'smem constant byte address 0x4 - core index']
  #allocation1 [shape = 'u32[144,128]{1,0:T(1,128)}', space=vmem, size = 0x12000, scoped, tag = 'internal scratch']
  #allocation2 [shape = 'f32[4,400]{1,0:T(4,128)}', space=vmem, size = 0x2000, scoped, tag = 'scratch operand']
  #allocation3 [shape = 'f32[12,256]{1,0:T(8,128)}', space=vmem, size = 0x4000, scoped, tag = 'scratch operand']
  %s0 = inlined_call_operand.hbm [shape: f32[2,4,256], index: 0, kind: input, shape index: {}]
  %s1 = inlined_call_operand.hbm [shape: f32[8,12], index: 1, kind: input, shape index: {}]
  %s2 = inlined_call_operand.hbm [shape: f32[2,8,256], index: 2, kind: output, shape index: {0}]
  %s3 = inlined_call_operand.vmem [shape: f32[2,8,2], index: 3, kind: output, shape index: {1}]
  %4 = xla_tuple %s2, %s3
  %s5 = sld [smem:[#allocation0]]
  $region57: #{tpu_custom_call.1} parent=0
    _
  %s7 = ssub.s32 1, %s5
  %s8 = scalar_select 0, %s7, %s5
  $region1: #{tpu_custom_call.1} parent=0
    #allocation4 [shape = 'u8[8192]{0}', space=vmem, size = 0x2000, scoped, tag = 'input window, operand 0']
    #allocation5 [shape = 's32[2]{0}', space=sflag, size = 0x8, scoped, tag = 'scoped memory for tpu_custom_call.1']
    #allocation6 [shape = 's32[2]{0}', space=sflag, size = 0x8, scoped, tag = 'scoped memory for tpu_custom_call.1']
    #allocation7 [shape = 'u8[4096]{0}', space=vmem, size = 0x1000, scoped, tag = 'input window, operand 1, single buffered']
    #allocation8 [shape = 's32[1]{0}', space=sflag, size = 0x4, scoped, tag = 'scoped memory for tpu_custom_call.1']
    #allocation9 [shape = 'u8[16384]{0}', space=vmem, size = 0x4000, scoped, tag = 'output window, operand 0']
    %9 = vsyncpa [#allocation5], 0
    %s10 = scalar_lea.sflag [#allocation5], 1
    %11 = vsyncpa %s10, 0
    %12 = vsyncpa [#allocation8], 0
    %13 = vsyncpa [#allocation6], 0
    %s14 = scalar_lea.sflag [#allocation6], 1
    %15 = vsyncpa %s14, 0
    loop: start=0, step=1, limit=4
    $region2: #{tpu_custom_call.1} parent=1 // loop_pre_header
      _
    $region3: #{tpu_custom_call.1} parent=1 // loop_header
      %s17 = sphi 0, %s21
      %p18 = scmp.ge.s32.totalorder %s17, 4
      %s27 = sphi 0, %s29
      %s30 = sphi 0, %s27
      %s31 = sphi 0, %s30
      %s47 = sphi 0, %s31
      %s51 = sphi 0, %s51
      %s53 = sphi 0, %s51
      %s54 = sphi 0, %s53
      %s68 = sphi 0, %s54
      %s74 = sphi 0, %s76
      %s77 = sphi 0, %s74
      %s78 = sphi 0, %s77
      %s94 = sphi 0, %s78
      %s100 = sphi 0, %s102
      %s103 = sphi 0, %s100
      %s104 = sphi 0, %s103
      %s120 = sphi 0, %s104
    $region4: #{tpu_custom_call.1} parent=1 // loop_header_branch
      %20 = sbr.rel (%p18) target = $region8
    $region5: #{tpu_custom_call.1} parent=1 // loop_body
      %s22 = ssub.s32 %s17, 1
      %s23 = ssub.s32 %s17, 2
      %s24 = sadd.s32 %s17, 1
      %s25 = ssub.s32 %s17, %s24
      %p26 = scmp.eq.s32.totalorder %s25, 0
      %s28 = sadd.s32 %s27, 1
      %s29 = scalar_select %p26, %s27, %s28
      %p32 = pneg %p26
      %p33 = scmp.eq.s32.totalorder %s17, 1
      %p34 = por %p32, %p33
      %p35 = scmp.ne.s32.totalorder %s27, %s30
      %p36 = scmp.eq.s32.totalorder %s17, 0
      %p37 = por %p35, %p36
      %p38 = scmp.ne.s32.totalorder %s27, %s30
      %p39 = scmp.eq.s32.totalorder %s22, 1
      %p40 = por %p38, %p39
      %p41 = scmp.ne.s32.totalorder %s30, %s31
      %p42 = scmp.eq.s32.totalorder %s22, 0
      %p43 = por %p41, %p42
      %p44 = scmp.ne.s32.totalorder %s30, %s31
      %p45 = scmp.eq.s32.totalorder %s23, 1
      %p46 = por %p44, %p45
      %p48 = scmp.ne.s32.totalorder %s31, %s47
      %p49 = scmp.eq.s32.totalorder %s23, 0
      %p50 = por %p48, %p49
      %s52 = sadd.s32 %s51, 1
      %p55 = scmp.eq.s32.totalorder %s17, 1
      %p56 = scmp.ne.s32.totalorder %s51, %s53
      %p57 = scmp.eq.s32.totalorder %s17, 0
      %p58 = por %p56, %p57
      %p59 = scmp.ne.s32.totalorder %s51, %s53
      %p60 = scmp.eq.s32.totalorder %s22, 1
      %p61 = por %p59, %p60
      %p62 = scmp.ne.s32.totalorder %s53, %s54
      %p63 = scmp.eq.s32.totalorder %s22, 0
      %p64 = por %p62, %p63
      %p65 = scmp.ne.s32.totalorder %s53, %s54
      %p66 = scmp.eq.s32.totalorder %s23, 1
      %p67 = por %p65, %p66
      %p69 = scmp.ne.s32.totalorder %s54, %s68
      %p70 = scmp.eq.s32.totalorder %s23, 0
      %p71 = por %p69, %p70
      %s72 = ssub.s32 %s17, %s24
      %p73 = scmp.eq.s32.totalorder %s72, 0
      %s75 = sadd.s32 %s74, 1
      %s76 = scalar_select %p73, %s74, %s75
      %p79 = pneg %p73
      %p80 = scmp.eq.s32.totalorder %s17, 1
      %p81 = por %p79, %p80
      %p82 = scmp.ne.s32.totalorder %s74, %s77
      %p83 = scmp.eq.s32.totalorder %s17, 0
      %p84 = por %p82, %p83
      %p85 = scmp.ne.s32.totalorder %s74, %s77
      %p86 = scmp.eq.s32.totalorder %s22, 1
      %p87 = por %p85, %p86
      %p88 = scmp.ne.s32.totalorder %s77, %s78
      %p89 = scmp.eq.s32.totalorder %s22, 0
      %p90 = por %p88, %p89
      %p91 = scmp.ne.s32.totalorder %s77, %s78
      %p92 = scmp.eq.s32.totalorder %s23, 1
      %p93 = por %p91, %p92
      %p95 = scmp.ne.s32.totalorder %s78, %s94
      %p96 = scmp.eq.s32.totalorder %s23, 0
      %p97 = por %p95, %p96
      %s98 = ssub.s32 %s17, %s24
      %p99 = scmp.eq.s32.totalorder %s98, 0
      %s101 = sadd.s32 %s100, 1
      %s102 = scalar_select %p99, %s100, %s101
      %p105 = pneg %p99
      %p106 = scmp.eq.s32.totalorder %s17, 1
      %p107 = por %p105, %p106
      %p108 = scmp.ne.s32.totalorder %s100, %s103
      %p109 = scmp.eq.s32.totalorder %s17, 0
      %p110 = por %p108, %p109
      %p111 = scmp.ne.s32.totalorder %s100, %s103
      %p112 = scmp.eq.s32.totalorder %s22, 1
      %p113 = por %p111, %p112
      %p114 = scmp.ne.s32.totalorder %s103, %s104
      %p115 = scmp.eq.s32.totalorder %s22, 0
      %p116 = por %p114, %p115
      %p117 = scmp.ne.s32.totalorder %s103, %s104
      %p118 = scmp.eq.s32.totalorder %s23, 1
      %p119 = por %p117, %p118
      %p121 = scmp.ne.s32.totalorder %s104, %s120
      %p122 = scmp.eq.s32.totalorder %s23, 0
      %p123 = por %p121, %p122
      %p124 = scmp.le.s32.totalorder 1, %s17
      %p125 = scmp.lt.s32.totalorder %s17, 3
      %p126 = pnand %p124, %p125
      %p127 = pneg %p126
      // Predicated region
      $region9: #{tpu_custom_call.1} parent=5 // pred_check
        _
      $region10: #{tpu_custom_call.1} parent=5 // pred_check_branch
        %129 = sbr.rel (%p126) target = $region12
      $region11: #{tpu_custom_call.1} parent=5 // pred_region
        %s130 = ssub.s32 %s17, 1
        // Predicated region
        $region13: #{tpu_custom_call.1} parent=11 // pred_check
          %p131 = pneg %p64
        $region14: #{tpu_custom_call.1} parent=11 // pred_check_branch
          %133 = sbr.rel (%p131) target = $region16
        $region15: #{tpu_custom_call.1} parent=11 // pred_region
          %s135 = ssub.s32 128, 128
          %136 = vsyncadd [#allocation8], %s135
          %s138 = sshll.u32 [#allocation7], 4
          %s139 = int_to_ptr.vmem [resolvable:$true] %s138
          %141 = dma.hbm_to_vmem [thread:$0]  %s1, 128, %s139, [#allocation8]
        $region16: #{tpu_custom_call.1} parent=11 // pred_fallthru
          _
      $region12: #{tpu_custom_call.1} parent=5 // pred_fallthru
        _
      %p142 = scmp.lt.s32.totalorder %s17, 2
      // Predicated region
      $region17: #{tpu_custom_call.1} parent=5 // pred_check
        %p143 = pneg %p142
      $region18: #{tpu_custom_call.1} parent=5 // pred_check_branch
        %145 = sbr.rel (%p143) target = $region20
      $region19: #{tpu_custom_call.1} parent=5 // pred_region
        // Predicated region
        $region21: #{tpu_custom_call.1} parent=19 // pred_check
          %p146 = pneg %p37
        $region22: #{tpu_custom_call.1} parent=19 // pred_check_branch
          %148 = sbr.rel (%p146) target = $region24
        $region23: #{tpu_custom_call.1} parent=19 // pred_region
          %s149 = sand.u32 %s27, 1
          %s150 = scalar_lea.sflag [#allocation5], %s149
          %s151 = sand.u32 %s27, 1
          %s152 = smul.addr %s151, 8
          %s153 = scalar_lea.vmem [#allocation4], %s152
          %s155 = ssub.s32 128, 128
          %156 = vsyncadd %s150, %s155
          %s157 = smul.addr %s17, 2
          %s158 = smul.addr %s157, 64
          %s159 = scalar_lea.hbm %s0, %s158
          %s161 = sshll.u32 %s153, 4
          %s162 = int_to_ptr.vmem [resolvable:$true] %s161
          %164 = dma.hbm_to_vmem [thread:$0]  %s159, 128, %s162, %s150
        $region24: #{tpu_custom_call.1} parent=19 // pred_fallthru
          _
      $region20: #{tpu_custom_call.1} parent=5 // pred_fallthru
        _
      %p165 = scmp.le.s32.totalorder 1, %s17
      %p166 = scmp.lt.s32.totalorder %s17, 3
      %p167 = pnand %p165, %p166
      %p168 = pneg %p167
      // Predicated region
      $region25: #{tpu_custom_call.1} parent=5 // pred_check
        _
      $region26: #{tpu_custom_call.1} parent=5 // pred_check_branch
        %170 = sbr.rel (%p167) target = $region28
      $region27: #{tpu_custom_call.1} parent=5 // pred_region
        %s171 = ssub.s32 %s17, 1
        %s172 = sand.u32 %s30, 1
        %s173 = scalar_lea.sflag [#allocation5], %s172
        %s174 = sand.u32 %s30, 1
        %s175 = smul.addr %s174, 8
        %s176 = scalar_lea.vmem [#allocation4], %s175
        // Predicated region
        $region29: #{tpu_custom_call.1} parent=27 // pred_check
          %p177 = pneg %p43
        $region30: #{tpu_custom_call.1} parent=27 // pred_check_branch
          %179 = sbr.rel (%p177) target = $region32
        $region31: #{tpu_custom_call.1} parent=27 // pred_region
          %180 = dma.done %s173, 128
        $region32: #{tpu_custom_call.1} parent=27 // pred_fallthru
          _
        // Predicated region
        $region33: #{tpu_custom_call.1} parent=27 // pred_check
          %p181 = pneg %p64
        $region34: #{tpu_custom_call.1} parent=27 // pred_check_branch
          %183 = sbr.rel (%p181) target = $region36
        $region35: #{tpu_custom_call.1} parent=27 // pred_region
          %184 = dma.done [#allocation8], 128
        $region36: #{tpu_custom_call.1} parent=27 // pred_fallthru
          _
        %s185 = sand.u32 %s30, 1
        %s186 = scalar_lea.sflag [#allocation5], %s185
        %s187 = sand.u32 %s30, 1
        %s188 = smul.addr %s187, 8
        %s189 = scalar_lea.vmem [#allocation4], %s188
        %p190 = pneg %p43
        %p191 = pneg %p40
        %p192 = pneg %p64
        %p193 = pneg %p61
        %p194 = pneg %p90
        %p195 = pneg %p87
        %s196 = sand.u32 %s77, 1
        %s197 = scalar_lea.sflag [#allocation6], %s196
        %s198 = sand.u32 %s77, 1
        %s199 = smul.addr %s198, 16
        %s200 = scalar_lea.vmem [#allocation9], %s199
        %p201 = pneg %p116
        %p202 = pneg %p113
        %p203 = scmp.lt.s32.totalorder %s22, 1
        %s204 = scalar_select %p203, %s22, 1
        %s205 = smul.addr %s204, 8
        %s206 = scalar_lea.vmem %s3, %s205
        %p207 = scmp.lt.s32.totalorder %s22, 1
        %s208 = scalar_select %p207, %s22, 1
        %s209 = smul.addr %s208, 8
        %s210 = scalar_lea.vmem %s3, %s209
        %vm211 = vcmask 1044352
        %212 = vst.msk [vmem:[#allocation2] sm:$0xf] %vm211, 0.0
        %vm213 = vcmask 125952
        %214 = vst.msk [vmem:[#allocation2 + $0xc] sm:$0xf] %vm213, 0.0
        %v215 = vld [vmem:[%s176] sm:$0xff]
        %216 = vst [vmem:[#allocation2 + $0x4] sm:$0xff] %v215
        %v217 = vld [vmem:[#allocation2] sm:$0xff]
        %v218 = vld [vmem:[#allocation2 + $0x8] sm:$0xf]
        %v221 = vcombine.high %v217, %v217
        %222 = vrot.lane.b32.xlu0 %v217, 16
        %v223 = vpop.permute.xlu0 %222
        %224 = vrot.lane.b32.xlu0 %v221, 16
        %v225 = vpop.permute.xlu0 %224
        %226 = vrot.lane.b32.xlu0 %v218, 16
        %v227 = vpop.permute.xlu0 %226
        %vm228 = vcmask 130048
        %v229 = vsel %vm228, %v223, %v225
        %v230 = vsel %vm228, %v225, %v227
        %233 = vst [vmem:[#allocation3] sm:$0xf] %v229
        %234 = vst [vmem:[#allocation3 + $0x8] sm:$0xf] %v230
        %v235 = vld [vmem:[#allocation2 + $0x4] sm:$0xff]
        %v237 = vcombine.low %v235, %v235
        %239 = vst [vmem:[#allocation3] sm:$0xf0] %v237
        %240 = vst [vmem:[#allocation3 + $0x8] sm:$0xf0] %v235
        %v241 = vld [vmem:[#allocation2 + $0x4] sm:$0xff]
        %v242 = vld [vmem:[#allocation2 + $0xc] sm:$0xf]
        %v245 = vcombine.high %v241, %v241
        %246 = vrot.lane.b32.xlu0 %v241, 112
        %v247 = vpop.permute.xlu0 %246
        %248 = vrot.lane.b32.xlu0 %v245, 112
        %v249 = vpop.permute.xlu0 %248
        %250 = vrot.lane.b32.xlu0 %v242, 112
        %v251 = vpop.permute.xlu0 %250
        %vm252 = vcmask 916480
        %v253 = vsel %vm252, %v247, %v249
        %v254 = vsel %vm252, %v249, %v251
        %257 = vst [vmem:[#allocation3 + $0x10] sm:$0xf] %v253
        %258 = vst [vmem:[#allocation3 + $0x18] sm:$0xf] %v254
        %v259 = vld [vmem:[#allocation7] sm:$0xff]
        %v260 = vld [vmem:[#allocation3] sm:$0xff]
        %v261 = vld [vmem:[#allocation3 + $0x8] sm:$0xff]
        %v262 = vld [vmem:[#allocation3 + $0x10] sm:$0xf]
        %v263 = vld [vmem:[#allocation3 + $0x18] sm:$0xf]
        %vm264 = vcmask 97280
        %v266 = vsel %vm264, %v259, 0
        %vm268 = vcmask 1043456
        %v270 = vsel %vm268, %v262, 0
        %v273 = vsel %vm268, %v263, 0
        %275 = vmatprep.subr.mxu0 0.0
        %276 = vmatpush1.msra.mxu0 0.0
        %277 = vmatprep.subr.mxu0 0.0
        %278 = vmatpush1.msra.mxu0 0.0
        %279 = vmatprep.subr.mxu0 0.0
        %280 = vmatpush1.msra.mxu0 0.0
        %281 = vmatprep.subr.mxu0 0.0
        %282 = vmatpush1.msra.mxu0 0.0
        %283 = vmatprep.subr.mxu0 0.0
        %284 = vmatpush1.msra.mxu0 0.0
        %285 = vmatprep.subr.mxu0 0.0
        %286 = vmatpush1.msra.mxu0 0.0
        %287 = vmatprep.subr.mxu0 0.0
        %288 = vmatpush1.msra.mxu0 0.0
        %289 = vmatprep.subr.mxu0 0.0
        %290 = vmatpush1.msra.mxu0 0.0
        %291 = vmatprep.subr.mxu0 0.0
        %292 = vmatpush1.msra.mxu0 0.0
        %293 = vmatprep.subr.mxu0 0.0
        %294 = vmatpush1.msra.mxu0 0.0
        %295 = vmatprep.subr.mxu0 0.0
        %296 = vmatpush1.msra.mxu0 0.0
        %297 = vmatprep.subr.mxu0 0.0
        %298 = vmatpush1.msra.mxu0 0.0
        %299 = vmatprep.subr.mxu0 0.0
        %300 = vmatpush1.msra.mxu0 0.0
        %301 = vmatprep.subr.mxu0 0.0
        %302 = vmatpush1.msra.mxu0 0.0
        %303 = vmatprep.subr.mxu0 %v273
        %304 = vmatpush1.msra.mxu0 %v270
        %305 = vmatprep.subr.mxu0 %v261
        %306 = vmatpush1.msra.mxu0 %v260
        %307 = vmatprep.subr.mxu0 0.0
        %308 = vmatpush2.msra.mxu0 0.0
        %309 = vmatprep.subr.mxu0 0.0
        %310 = vmatpush2.msra.mxu0 0.0
        %311 = vmatprep.subr.mxu0 0.0
        %312 = vmatpush2.msra.mxu0 0.0
        %313 = vmatprep.subr.mxu0 0.0
        %314 = vmatpush2.msra.mxu0 0.0
        %315 = vmatprep.subr.mxu0 0.0
        %316 = vmatpush2.msra.mxu0 0.0
        %317 = vmatprep.subr.mxu0 0.0
        %318 = vmatpush2.msra.mxu0 0.0
        %319 = vmatprep.subr.mxu0 0.0
        %320 = vmatpush2.msra.mxu0 0.0
        %321 = vmatprep.subr.mxu0 0.0
        %322 = vmatpush2.msra.mxu0 0.0
        %323 = vmatprep.subr.mxu0 0.0
        %324 = vmatpush2.msra.mxu0 0.0
        %325 = vmatprep.subr.mxu0 0.0
        %326 = vmatpush2.msra.mxu0 0.0
        %327 = vmatprep.subr.mxu0 0.0
        %328 = vmatpush2.msra.mxu0 0.0
        %329 = vmatprep.subr.mxu0 0.0
        %330 = vmatpush2.msra.mxu0 0.0
        %331 = vmatprep.subr.mxu0 0.0
        %332 = vmatpush2.msra.mxu0 0.0
        %333 = vmatprep.subr.mxu0 0.0
        %334 = vmatpush2.msra.mxu0 0.0
        %335 = vmatprep.subr.mxu0 0.0
        %336 = vmatpush2.msra.mxu0 0.0
        %337 = vmatprep.subr.mxu0 0.0
        %338 = vmatpush2.msra.mxu0 0.0
        %339 = vmatprep.mubr.f32.mxu0 0.0
        %340 = vmatmul.mubr.f32.gmra.mxu0 %v266
        %v341 = vpop.f32.mrf.mxu0
        %v342 = vadd.f32 0.0, %v341
        %v343 = vpop.f32.mrf.mxu0
        %v344 = vadd.f32 0.0, %v343
        %345 = vdwg.mxu0
        %346 = vst [vmem:[%s200] sm:$0xff] %v342
        %347 = vst [vmem:[%s200 + $0x8] sm:$0xff] %v344
        %v348 = vadd.f32 %v342, %v344
        %349 = vadd.xlane.f32.xlu0 %v348
        %v350 = vpop.xlane.xlu0 %349
        %v351 = vmul.f32 %v342, %v342
        %v352 = vmul.f32 %v344, %v344
        %v353 = vadd.f32 %v351, %v352
        %354 = vadd.xlane.f32.xlu0 %v353
        %v355 = vpop.xlane.xlu0 %354
        %vm356 = vcmask 7168
        %v357 = vsel %vm356, %v350, %v355
        %vm358 = vcmask 15360
        %359 = vst.msk [vmem:[%s210] sm:$0xff] %vm358, %v357
        %s360 = sand.u32 %s77, 1
        %s361 = scalar_lea.sflag [#allocation6], %s360
        %s362 = sand.u32 %s77, 1
        %s363 = smul.addr %s362, 16
        %s364 = scalar_lea.vmem [#allocation9], %s363
        %p365 = scmp.lt.s32.totalorder %s22, 1
        %s366 = scalar_select %p365, %s22, 1
        %s367 = smul.addr %s366, 8
        %s368 = scalar_lea.vmem %s3, %s367
        // Predicated region
        $region37: #{tpu_custom_call.1} parent=27 // pred_check
          %p369 = pneg %p87
        $region38: #{tpu_custom_call.1} parent=27 // pred_check_branch
          %371 = sbr.rel (%p369) target = $region40
        $region39: #{tpu_custom_call.1} parent=27 // pred_region
          %s373 = ssub.s32 256, 256
          %374 = vsyncadd %s361, %s373
          %s375 = smul.addr %s22, 2
          %s376 = smul.addr %s375, 128
          %s377 = scalar_lea.hbm %s2, %s376
          %s379 = sshll.u32 %s364, 4
          %s380 = int_to_ptr.vmem [resolvable:$true] %s379
          %382 = dma.vmem_to_hbm [thread:$0]  %s380, 256, %s377, %s361
        $region40: #{tpu_custom_call.1} parent=27 // pred_fallthru
          _
        // Predicated region
        $region41: #{tpu_custom_call.1} parent=27 // pred_check
          %p383 = pneg %p113
        $region42: #{tpu_custom_call.1} parent=27 // pred_check_branch
          %385 = sbr.rel (%p383) target = $region44
        $region43: #{tpu_custom_call.1} parent=27 // pred_region
          _
        $region44: #{tpu_custom_call.1} parent=27 // pred_fallthru
          _
      $region28: #{tpu_custom_call.1} parent=5 // pred_fallthru
        _
      %p386 = scmp.le.s32.totalorder 2, %s17
      // Predicated region
      $region45: #{tpu_custom_call.1} parent=5 // pred_check
        %p387 = pneg %p386
      $region46: #{tpu_custom_call.1} parent=5 // pred_check_branch
        %389 = sbr.rel (%p387) target = $region48
      $region47: #{tpu_custom_call.1} parent=5 // pred_region
        %s390 = ssub.s32 %s17, 2
        // Predicated region
        $region49: #{tpu_custom_call.1} parent=47 // pred_check
          %p391 = pneg %p93
        $region50: #{tpu_custom_call.1} parent=47 // pred_check_branch
          %393 = sbr.rel (%p391) target = $region52
        $region51: #{tpu_custom_call.1} parent=47 // pred_region
          %s394 = sand.u32 %s78, 1
          %s395 = scalar_lea.sflag [#allocation6], %s394
          %s396 = sand.u32 %s78, 1
          %s397 = smul.addr %s396, 16
          %s398 = scalar_lea.vmem [#allocation9], %s397
          %399 = dma.done %s395, 256
        $region52: #{tpu_custom_call.1} parent=47 // pred_fallthru
          _
        // Predicated region
        $region53: #{tpu_custom_call.1} parent=47 // pred_check
          %p400 = pneg %p119
        $region54: #{tpu_custom_call.1} parent=47 // pred_check_branch
          %402 = sbr.rel (%p400) target = $region56
        $region55: #{tpu_custom_call.1} parent=47 // pred_region
          %p403 = scmp.lt.s32.totalorder %s23, 1
          %s404 = scalar_select %p403, %s23, 1
          %s405 = smul.addr %s404, 8
          %s406 = scalar_lea.vmem %s3, %s405
        $region56: #{tpu_custom_call.1} parent=47 // pred_fallthru
          _
      $region48: #{tpu_custom_call.1} parent=5 // pred_fallthru
        _
    $region6: #{tpu_custom_call.1} parent=1 // loop_footer
      %s21 = sadd.s32 1, %s17
    $region7: #{tpu_custom_call.1} parent=1 // loop_footer_branch
      %16 = sbr.rel target = $region3
    $region8: #{tpu_custom_call.1} parent=1 // loop_exit
      _
    %407 = vsyncpa [#allocation5], 1
    %s408 = scalar_lea.sflag [#allocation5], 1
    %409 = vsyncpa %s408, 1
    %410 = vsyncpa [#allocation8], 1
    %411 = vsyncpa [#allocation6], 1
    %s412 = scalar_lea.sflag [#allocation6], 1
    %413 = vsyncpa %s412, 1

</llo_original>
